<compile_context>
chip_gen: v7x
topology: tpu7x:2x2x1
jax: 0.10.0
libtpu: 0.0.40
codegen_flags: <defaults>
</compile_context>

<pallas_src>
import functools

import jax
import jax.numpy as jnp
from jax.experimental import pallas as pl
from jax.experimental.pallas import tpu as pltpu

_LANE = 128
_SUBLANE = 8
_MAX_LANE_TILE = 2048          # starting lane tile for the streaming passes
_MAX_ROW_TILE = 512            # multiple of 32 -> legal for every dtype packing
_TARGET_TILE_BYTES = 4 * 1024 * 1024
_SQUEEZE_MAX_CHUNKS = 16       # bound on unrolled lane chunks in the fused squeeze


def _round_up(x, m):
    return (x + m - 1) // m * m


def _sublane_pack(dtype):
    """Rows per packed vreg sublane group for this dtype (8/16/32)."""
    itemsize = jnp.dtype(dtype).itemsize
    return max(_SUBLANE, 32 // max(itemsize, 1))


def _vmem_capacity_bytes():
    """Physical VMEM per core; falls back to the smallest (v7x, 64 MiB)."""
    try:
        info = pltpu.get_tpu_info()
        cap = int(getattr(info, "vmem_capacity_bytes", 0))
        if cap > 0:
            return cap
    except Exception:  # noqa: BLE001 - best-effort hardware query
        pass
    return 64 * 1024 * 1024


def _pick_row_tile(n, sub):
    """Row tile: big, legal (multiple of 8 or == full dim), >=2 steps if possible."""
    if n > _MAX_ROW_TILE:
        return _MAX_ROW_TILE
    if n <= sub:
        return n                               # block == full row extent
    half = _round_up(-(-n // 2), sub)          # aim for >=2 steps (v7x dual-TC)
    return half if half < n else n


def _pick_lane_tile(hw, tr, itemsize):
    """Lane tile: multiple of 128 (or full extent), tile capped at ~4 MiB."""
    if hw <= _MAX_LANE_TILE:
        return hw                              # block == full lane extent
    tl = _MAX_LANE_TILE
    hw_pad = _round_up(hw, _LANE)
    while tl < hw_pad and tr * (2 * tl) * itemsize <= _TARGET_TILE_BYTES:
        tl *= 2
    return min(tl, hw_pad)


# ---------------------------------------------------------------------------
# Two-pass (tiled streaming) path
# ---------------------------------------------------------------------------


def _row_sum_kernel(x_ref, sum_ref, acc_ref, *, hw, tl, lane_groups):
    # x_ref: (tr, tl) tile of the (B*C, HW) slab (last tiles may be ragged).
    # sum_ref: (tr, 1) per-row sums, resident across the lane-tile axis.
    # acc_ref: lane-dense (tr, 128) f32 accumulator (or (tr, 1) for tiny tiles).
    j = pl.program_id(1)

    @pl.when(j == 0)
    def _():
        acc_ref[...] = jnp.zeros_like(acc_ref)

    if lane_groups > 1:
        # Lane-dense accumulation: 128-lane element-wise adds on the VPU.
        ragged = (hw % tl) != 0
        partial = None
        for g in range(lane_groups):
            xg = x_ref[:, g * _LANE:(g + 1) * _LANE].astype(jnp.float32)
            if ragged:
                col = (j * tl + g * _LANE
                       + jax.lax.broadcasted_iota(jnp.int32, xg.shape, 1))
                xg = jnp.where(col < hw, xg, 0.0)   # mask OOB lanes (garbage reads)
            partial = xg if partial is None else partial + xg
        acc_ref[...] += partial
    else:
        # Single small lane tile equal to the full extent (never ragged).
        acc_ref[...] += jnp.sum(x_ref[...].astype(jnp.float32), axis=-1,
                                keepdims=True)

    @pl.when(j == pl.num_programs(1) - 1)
    def _():
        # One cross-lane reduce (XLU) per row tile.
        sum_ref[...] = jnp.sum(acc_ref[...], axis=-1, keepdims=True)


def _row_scale_kernel(x_ref, s_ref, o_ref):
    # x_ref/o_ref: (tr, tl) lane-dense tiles; s_ref: (tr, 1) f32 per-row scales.
    x = x_ref[...].astype(jnp.float32)
    o_ref[...] = (x * s_ref[...]).astype(o_ref.dtype)


def _se_two_pass(x, w1, b1, w2, b2, vmem_limit):
    B, C, H, W = x.shape
    HW = H * W
    N = B * C
    itemsize = jnp.dtype(x.dtype).itemsize
    sub = _sublane_pack(x.dtype)

    tr = _pick_row_tile(N, sub)
    tl = _pick_lane_tile(HW, tr, itemsize)
    grid = (pl.cdiv(N, tr), pl.cdiv(HW, tl))
    lane_groups = tl // _LANE if tl % _LANE == 0 else 1
    acc_shape = (tr, _LANE if lane_groups > 1 else 1)

    x2 = x.reshape(N, HW)   # free reshape; no padding, no extra HBM traffic

    # ---- Pass 1: per-(batch, channel) spatial sums (squeeze). ----
    sum_kernel = functools.partial(_row_sum_kernel, hw=HW, tl=tl,
                                   lane_groups=lane_groups)
    row_sums = pl.pallas_call(
        sum_kernel,
        out_shape=jax.ShapeDtypeStruct((N, 1), jnp.float32),
        grid_spec=pltpu.PrefetchScalarGridSpec(
            num_scalar_prefetch=0,
            grid=grid,
            in_specs=[pl.BlockSpec((tr, tl), lambda i, j: (i, j))],
            out_specs=pl.BlockSpec((tr, 1), lambda i, j: (i, 0)),
            scratch_shapes=[pltpu.VMEM(acc_shape, jnp.float32)],
        ),
        compiler_params=pltpu.CompilerParams(
            dimension_semantics=("parallel", "arbitrary"),
            vmem_limit_bytes=vmem_limit,
        ),
        cost_estimate=pl.CostEstimate(
            flops=N * HW, transcendentals=0,
            bytes_accessed=N * HW * itemsize + N * 4),
    )(x2)

    # ---- Excitation: tiny FCs on the (B, C) means, in plain XLA. ----
    means = row_sums[:, 0].reshape(B, C) * jnp.float32(1.0 / HW)
    h = jnp.maximum(means @ w1.T.astype(jnp.float32) + b1.astype(jnp.float32), 0.0)
    scale = jax.nn.sigmoid(h @ w2.T.astype(jnp.float32) + b2.astype(jnp.float32))
    row_scale = scale.reshape(N, 1)   # f32, no padding

    # ---- Pass 2: lane-dense per-row recalibration (bulk of HBM traffic). ----
    out2 = pl.pallas_call(
        _row_scale_kernel,
        out_shape=jax.ShapeDtypeStruct((N, HW), x.dtype),
        grid_spec=pltpu.PrefetchScalarGridSpec(
            num_scalar_prefetch=0,
            grid=grid,
            in_specs=[
                pl.BlockSpec((tr, tl), lambda i, j: (i, j)),
                pl.BlockSpec((tr, 1), lambda i, j: (i, 0)),
            ],
            out_specs=pl.BlockSpec((tr, tl), lambda i, j: (i, j)),
        ),
        compiler_params=pltpu.CompilerParams(
            dimension_semantics=("parallel", "parallel"),
            vmem_limit_bytes=vmem_limit,
        ),
        cost_estimate=pl.CostEstimate(
            flops=N * HW, transcendentals=0,
            bytes_accessed=2 * N * HW * itemsize + N * 4),
    )(x2, row_scale)

    return out2.reshape(B, C, H, W)   # free reshape (no slice copy)


# ---------------------------------------------------------------------------
# Single-pass fused path for slabs that fit VMEM: 1 read + 1 write of x.
# ---------------------------------------------------------------------------


def _se_fused_kernel(x_ref, w1t_ref, b1_ref, w2t_ref, b2_ref, o_ref,
                     *, inv_hw, hw):
    # x_ref/o_ref: (bt, C, HW) block of `bt` batch elements.
    # Squeeze: chunked f32 accumulation over lane chunks (no whole-slab f32 temp).
    chunk = max(_LANE, _round_up(-(-hw // _SQUEEZE_MAX_CHUNKS), _LANE))
    s = None
    start = 0
    while start < hw:
        size = min(chunk, hw - start)
        xg = x_ref[:, :, start:start + size].astype(jnp.float32)
        ps = jnp.sum(xg, axis=-1)                       # (bt, C)
        s = ps if s is None else s + ps
        start += size
    means = s * inv_hw                                  # (bt, C)

    # Excitation: fc1 -> ReLU -> fc2 -> sigmoid, all in f32.
    h = jnp.dot(means, w1t_ref[...], preferred_element_type=jnp.float32) + b1_ref[...]
    h = jnp.maximum(h, 0.0)                             # (bt, C_red)
    z = jnp.dot(h, w2t_ref[...], preferred_element_type=jnp.float32) + b2_ref[...]
    scale = 1.0 / (1.0 + jnp.exp(-z))                   # (bt, C)

    # Recalibrate in the input dtype (scale cast down; avoids an f32 slab temp).
    x = x_ref[...]
    o_ref[...] = (x * scale[:, :, None].astype(x.dtype)).astype(o_ref.dtype)


def _pick_batch_tile(B, C, HW, dtype, budget):
    """Batches per fused block, or 0 if the fused path does not fit VMEM."""
    sub = _sublane_pack(dtype)
    itemsize = jnp.dtype(dtype).itemsize
    # Padded VMEM footprint of one (C, HW) slab (sublane/lane tiling).
    per_batch = _round_up(C, sub) * _round_up(HW, _LANE) * itemsize
    bt = budget // (4 * per_batch)      # 2 input + 2 output pipeline buffers
    if bt < 1:
        return 0
    bt = min(bt, B)
    if B >= 2:
        bt = min(bt, -(-B // 2))        # >=2 'parallel' steps for v7x dual-TC
    return max(int(bt), 1)


def _se_fused(x, w1, b1, w2, b2, bt, vmem_limit):
    B, C, H, W = x.shape
    C_red = w1.shape[0]
    HW = H * W
    itemsize = jnp.dtype(x.dtype).itemsize

    x3 = x.reshape(B, C, HW)   # free reshape, no padding

    w1t = w1.T.astype(jnp.float32)                  # (C, C_red)
    w2t = w2.T.astype(jnp.float32)                  # (C_red, C)
    b1_2d = b1.reshape(1, C_red).astype(jnp.float32)
    b2_2d = b2.reshape(1, C).astype(jnp.float32)

    kernel = functools.partial(_se_fused_kernel, inv_hw=1.0 / HW, hw=HW)
    out3 = pl.pallas_call(
        kernel,
        out_shape=jax.ShapeDtypeStruct((B, C, HW), x.dtype),
        grid_spec=pltpu.PrefetchScalarGridSpec(
            num_scalar_prefetch=0,
            grid=(pl.cdiv(B, bt),),
            in_specs=[
                pl.BlockSpec((bt, C, HW), lambda b: (b, 0, 0)),
                pl.BlockSpec((C, C_red), lambda b: (0, 0)),
                pl.BlockSpec((1, C_red), lambda b: (0, 0)),
                pl.BlockSpec((C_red, C), lambda b: (0, 0)),
                pl.BlockSpec((1, C), lambda b: (0, 0)),
            ],
            out_specs=pl.BlockSpec((bt, C, HW), lambda b: (b, 0, 0)),
        ),
        compiler_params=pltpu.CompilerParams(
            dimension_semantics=("parallel",),
            vmem_limit_bytes=vmem_limit,
        ),
        cost_estimate=pl.CostEstimate(
            flops=2 * B * C * HW + 4 * B * C * C_red,
            transcendentals=B * C,
            bytes_accessed=2 * B * C * HW * itemsize),
    )(x3, w1t, b1_2d, w2t, b2_2d)

    return out3.reshape(B, C, H, W)


# ---------------------------------------------------------------------------
# Public entry point
# ---------------------------------------------------------------------------


def channel_se_layer(x, w1, b1, w2, b2, *, force_two_pass=False):
    """x: (B, C, H, W); w1: (C_red, C); b1: (C_red,); w2: (C, C_red); b2: (C,)."""
    B, C, H, W = x.shape
    HW = H * W

    # Generation-aware VMEM sizing (128 MiB v5e/v6e, 64 MiB v7x).
    vmem_cap = _vmem_capacity_bytes()
    vmem_limit = (vmem_cap * 3) // 4            # ~48 MiB (v7x) / ~96 MiB (v5e/v6e)
    fused_budget = (vmem_cap * 9) // 16         # ~36 MiB (v7x) / ~72 MiB (v5e/v6e)

    if not force_two_pass:
        bt = _pick_batch_tile(B, C, HW, x.dtype, fused_budget)
        if bt > 0:
            return _se_fused(x, w1, b1, w2, b2, bt, vmem_limit)
    return _se_two_pass(x, w1, b1, w2, b2, vmem_limit)


def _reference(x, w1, b1, w2, b2):
    B, C, H, W = x.shape
    s = x.reshape(B, C, -1).mean(axis=2)
    h = jnp.maximum(s @ w1.T + b1, 0.0)
    scale = jax.nn.sigmoid(h @ w2.T + b2)
    return x * scale[:, :, None, None]


if __name__ == "__main__":
    B, C, H, W = 2, 4, 16, 16
    reduction_ratio = 2
    C_red = C // reduction_ratio

    key = jax.random.PRNGKey(0)
    kx, kw1, kb1, kw2, kb2 = jax.random.split(key, 5)

    x = jax.random.normal(kx, (B, C, H, W), dtype=jnp.float32)

    # PyTorch-Linear-like uniform(-1/sqrt(fan_in), 1/sqrt(fan_in)) init.
    bound1 = 1.0 / jnp.sqrt(C)
    w1 = jax.random.uniform(kw1, (C_red, C), jnp.float32, -bound1, bound1)
    b1 = jax.random.uniform(kb1, (C_red,), jnp.float32, -bound1, bound1)
    bound2 = 1.0 / jnp.sqrt(C_red)
    w2 = jax.random.uniform(kw2, (C, C_red), jnp.float32, -bound2, bound2)
    b2 = jax.random.uniform(kb2, (C,), jnp.float32, -bound2, bound2)

    ref = _reference(x, w1, b1, w2, b2)

    # Auto path (small slab -> fused single-pass kernel).
    out = jax.block_until_ready(channel_se_layer(x, w1, b1, w2, b2))
    assert out.shape == (B, C, H, W)
    assert jnp.allclose(out, ref, atol=1e-5, rtol=1e-5), "fused path mismatch"

    # Tiled two-pass path (the one used for large C*H*W sizes).
    out_tiled = jax.block_until_ready(
        channel_se_layer(x, w1, b1, w2, b2, force_two_pass=True))
    assert out_tiled.shape == (B, C, H, W)
    assert jnp.allclose(out_tiled, ref, atol=1e-5, rtol=1e-5), "tiled path mismatch"

    print("KERNEL_OK")
</pallas_src>

<mosaic_0001>
module attributes {stable_mosaic.version = 11 : i64} {
  func.func @_se_fused_kernel(%arg0: i32, %arg1: memref<1x4x256xf32, #tpu.memory_space<vmem>>, %arg2: memref<4x2xf32, #tpu.memory_space<vmem>>, %arg3: memref<1x2xf32, #tpu.memory_space<vmem>>, %arg4: memref<2x4xf32, #tpu.memory_space<vmem>>, %arg5: memref<1x4xf32, #tpu.memory_space<vmem>>, %arg6: memref<1x4x256xf32, #tpu.memory_space<vmem>>) attributes {dimension_semantics = [#tpu.dimension_semantics<parallel>], iteration_bounds = array<i64: 2>, scalar_prefetch = 0 : i64, scratch_operands = 0 : i64, tpu.core_type = #tpu.core_type<tc>, window_params = [{transform_indices = @transform_0, window_bounds = array<i64: 1, 4, 256>}, {pipeline_mode = #tpu.pipeline_mode<synchronous>, transform_indices = @transform_1, window_bounds = array<i64: 4, 2>}, {pipeline_mode = #tpu.pipeline_mode<synchronous>, transform_indices = @transform_2, window_bounds = array<i64: 1, 2>}, {pipeline_mode = #tpu.pipeline_mode<synchronous>, transform_indices = @transform_3, window_bounds = array<i64: 2, 4>}, {pipeline_mode = #tpu.pipeline_mode<synchronous>, transform_indices = @transform_4, window_bounds = array<i64: 1, 4>}, {transform_indices = @transform_5, window_bounds = array<i64: 1, 4, 256>}]} {
    %c0 = arith.constant 0 : index
    %c0_0 = arith.constant 0 : index
    %c0_1 = arith.constant 0 : index
    %0 = vector.load %arg1[%c0, %c0_0, %c0_1] : memref<1x4x256xf32, #tpu.memory_space<vmem>>, vector<1x4x128xf32>
    %cst = arith.constant dense<0.000000e+00> : vector<1x4xf32>
    %1 = vector.multi_reduction <add>, %0, %cst [2] : vector<1x4x128xf32> to vector<1x4xf32>
    %c0_2 = arith.constant 0 : index
    %c0_3 = arith.constant 0 : index
    %c128 = arith.constant 128 : index
    %2 = vector.load %arg1[%c0_2, %c0_3, %c128] : memref<1x4x256xf32, #tpu.memory_space<vmem>>, vector<1x4x128xf32>
    %cst_4 = arith.constant dense<0.000000e+00> : vector<1x4xf32>
    %3 = vector.multi_reduction <add>, %2, %cst_4 [2] : vector<1x4x128xf32> to vector<1x4xf32>
    %4 = arith.addf %1, %3 : vector<1x4xf32>
    %cst_5 = arith.constant 3.906250e-03 : f32
    %5 = vector.broadcast %cst_5 : f32 to vector<1x4xf32>
    %6 = arith.mulf %4, %5 : vector<1x4xf32>
    %c0_6 = arith.constant 0 : index
    %c0_7 = arith.constant 0 : index
    %7 = vector.load %arg2[%c0_6, %c0_7] : memref<4x2xf32, #tpu.memory_space<vmem>>, vector<4x2xf32>
    %cst_8 = arith.constant dense<0.000000e+00> : vector<1x2xf32>
    %8 = tpu.matmul %6, %7, %cst_8 {dimension_numbers = #tpu.dot_dimension_numbers<[1], [0], [0], [1], [0, 0, 1, 1], [], []>} : vector<1x4xf32>, vector<4x2xf32>, vector<1x2xf32> -> vector<1x2xf32>
    %c0_9 = arith.constant 0 : index
    %c0_10 = arith.constant 0 : index
    %9 = vector.load %arg3[%c0_9, %c0_10] : memref<1x2xf32, #tpu.memory_space<vmem>>, vector<1x2xf32>
    %10 = arith.addf %8, %9 : vector<1x2xf32>
    %cst_11 = arith.constant 0.000000e+00 : f32
    %11 = vector.broadcast %cst_11 : f32 to vector<1x2xf32>
    %12 = arith.maximumf %10, %11 : vector<1x2xf32>
    %c0_12 = arith.constant 0 : index
    %c0_13 = arith.constant 0 : index
    %13 = vector.load %arg4[%c0_12, %c0_13] : memref<2x4xf32, #tpu.memory_space<vmem>>, vector<2x4xf32>
    %cst_14 = arith.constant dense<0.000000e+00> : vector<1x4xf32>
    %14 = tpu.matmul %12, %13, %cst_14 {dimension_numbers = #tpu.dot_dimension_numbers<[1], [0], [0], [1], [0, 0, 1, 1], [], []>} : vector<1x2xf32>, vector<2x4xf32>, vector<1x4xf32> -> vector<1x4xf32>
    %c0_15 = arith.constant 0 : index
    %c0_16 = arith.constant 0 : index
    %15 = vector.load %arg5[%c0_15, %c0_16] : memref<1x4xf32, #tpu.memory_space<vmem>>, vector<1x4xf32>
    %16 = arith.addf %14, %15 : vector<1x4xf32>
    %cst_17 = arith.constant 0.000000e+00 : f32
    %17 = vector.broadcast %cst_17 : f32 to vector<1x4xf32>
    %18 = arith.subf %17, %16 : vector<1x4xf32>
    %19 = math.exp %18 : vector<1x4xf32>
    %cst_18 = arith.constant 1.000000e+00 : f32
    %20 = vector.broadcast %cst_18 : f32 to vector<1x4xf32>
    %21 = arith.addf %20, %19 : vector<1x4xf32>
    %cst_19 = arith.constant 1.000000e+00 : f32
    %22 = vector.broadcast %cst_19 : f32 to vector<1x4xf32>
    %23 = arith.divf %22, %21 : vector<1x4xf32>
    %c0_20 = arith.constant 0 : index
    %c0_21 = arith.constant 0 : index
    %c0_22 = arith.constant 0 : index
    %24 = vector.load %arg1[%c0_20, %c0_21, %c0_22] : memref<1x4x256xf32, #tpu.memory_space<vmem>>, vector<1x4x256xf32>
    %25 = vector.shape_cast %23 : vector<1x4xf32> to vector<1x4x1xf32>
    %26 = vector.broadcast %25 : vector<1x4x1xf32> to vector<1x4x256xf32>
    %27 = arith.mulf %24, %26 : vector<1x4x256xf32>
    %c0_23 = arith.constant 0 : index
    %c0_24 = arith.constant 0 : index
    %c0_25 = arith.constant 0 : index
    %28 = vector.load %arg6[%c0_23, %c0_24, %c0_25] : memref<1x4x256xf32, #tpu.memory_space<vmem>>, vector<1x4x256xf32>
    tpu.vector_store %arg6[%c0_23, %c0_24, %c0_25], %27 {strides = array<i32>} : memref<1x4x256xf32, #tpu.memory_space<vmem>>, vector<1x4x256xf32>,
    return
  }
  func.func @transform_0(%arg0: i32) -> (i32, i32, i32) {
    %c0_i32 = arith.constant 0 : i32
    %c0_i32_0 = arith.constant 0 : i32
    %c0_i32_1 = arith.constant 0 : i32
    return %arg0, %c0_i32, %c0_i32_0 : i32, i32, i32
  }
  func.func @transform_1(%arg0: i32) -> (i32, i32) {
    %c0_i32 = arith.constant 0 : i32
    %c0_i32_0 = arith.constant 0 : i32
    %c0_i32_1 = arith.constant 0 : i32
    return %c0_i32, %c0_i32_0 : i32, i32
  }
  func.func @transform_2(%arg0: i32) -> (i32, i32) {
    %c0_i32 = arith.constant 0 : i32
    %c0_i32_0 = arith.constant 0 : i32
    %c0_i32_1 = arith.constant 0 : i32
    return %c0_i32, %c0_i32_0 : i32, i32
  }
  func.func @transform_3(%arg0: i32) -> (i32, i32) {
    %c0_i32 = arith.constant 0 : i32
    %c0_i32_0 = arith.constant 0 : i32
    %c0_i32_1 = arith.constant 0 : i32
    return %c0_i32, %c0_i32_0 : i32, i32
  }
  func.func @transform_4(%arg0: i32) -> (i32, i32) {
    %c0_i32 = arith.constant 0 : i32
    %c0_i32_0 = arith.constant 0 : i32
    %c0_i32_1 = arith.constant 0 : i32
    return %c0_i32, %c0_i32_0 : i32, i32
  }
  func.func @transform_5(%arg0: i32) -> (i32, i32, i32) {
    %c0_i32 = arith.constant 0 : i32
    %c0_i32_0 = arith.constant 0 : i32
    %c0_i32_1 = arith.constant 0 : i32
    return %arg0, %c0_i32, %c0_i32_0 : i32, i32, i32
  }
}

</mosaic_0001>

<llo_original>
// kernel: tpu_custom_call.1
$region0: #{tpu_custom_call.1}
  #allocation0 [shape = 'u32[]', space=smem, size = 0x4, offset = 0x4, fixed_abs, tag = 'smem constant byte address 0x4 - core index']
  #allocation1 [shape = 'u32[144,128]{1,0:T(1,128)}', space=vmem, size = 0x12000, scoped, tag = 'internal scratch']
  %s0 = inlined_call_operand.hbm [shape: f32[2,4,256], index: 0, kind: input, shape index: {}]
  %s1 = inlined_call_operand.vmem [shape: f32[4,2], index: 1, kind: input, shape index: {}]
  %s2 = inlined_call_operand.vmem [shape: f32[1,2], index: 2, kind: input, shape index: {}]
  %s3 = inlined_call_operand.vmem [shape: f32[2,4], index: 3, kind: input, shape index: {}]
  %s4 = inlined_call_operand.vmem [shape: f32[1,4], index: 4, kind: input, shape index: {}]
  %s5 = inlined_call_operand.hbm [shape: f32[2,4,256], index: 5, kind: output, shape index: {}]
  %s6 = sld [smem:[#allocation0]]
  $region57: #{tpu_custom_call.1} parent=0
    _
  %s8 = ssub.s32 1, %s6
  %s9 = scalar_select 0, %s8, %s6
  $region1: #{tpu_custom_call.1} parent=0
    #allocation2 [shape = 'u8[8192]{0}', space=vmem, size = 0x2000, scoped, tag = 'input window, operand 0']
    #allocation3 [shape = 's32[2]{0}', space=sflag, size = 0x8, scoped, tag = 'scoped memory for tpu_custom_call.1']
    #allocation4 [shape = 's32[2]{0}', space=sflag, size = 0x8, scoped, tag = 'scoped memory for tpu_custom_call.1']
    #allocation5 [shape = 'u8[8192]{0}', space=vmem, size = 0x2000, scoped, tag = 'output window, operand 0']
    %10 = vsyncpa [#allocation3], 0
    %s11 = scalar_lea.sflag [#allocation3], 1
    %12 = vsyncpa %s11, 0
    %13 = vsyncpa [#allocation4], 0
    %s14 = scalar_lea.sflag [#allocation4], 1
    %15 = vsyncpa %s14, 0
    loop: start=0, step=1, limit=4
    $region2: #{tpu_custom_call.1} parent=1 // loop_pre_header
      _
    $region3: #{tpu_custom_call.1} parent=1 // loop_header
      %s17 = sphi 0, %s21
      %p18 = scmp.ge.s32.totalorder %s17, 4
      %s27 = sphi 0, %s29
      %s30 = sphi 0, %s27
      %s31 = sphi 0, %s30
      %s47 = sphi 0, %s31
      %s51 = sphi 0, %s51
      %s53 = sphi 0, %s51
      %s54 = sphi 0, %s53
      %s68 = sphi 0, %s54
      %s72 = sphi 0, %s72
      %s74 = sphi 0, %s72
      %s75 = sphi 0, %s74
      %s89 = sphi 0, %s75
      %s93 = sphi 0, %s93
      %s95 = sphi 0, %s93
      %s96 = sphi 0, %s95
      %s110 = sphi 0, %s96
      %s114 = sphi 0, %s114
      %s116 = sphi 0, %s114
      %s117 = sphi 0, %s116
      %s131 = sphi 0, %s117
      %s137 = sphi 0, %s139
      %s140 = sphi 0, %s137
      %s141 = sphi 0, %s140
      %s157 = sphi 0, %s141
    $region4: #{tpu_custom_call.1} parent=1 // loop_header_branch
      %20 = sbr.rel (%p18) target = $region8
    $region5: #{tpu_custom_call.1} parent=1 // loop_body
      %s22 = ssub.s32 %s17, 1
      %s23 = ssub.s32 %s17, 2
      %s24 = sadd.s32 %s17, 1
      %s25 = ssub.s32 %s17, %s24
      %p26 = scmp.eq.s32.totalorder %s25, 0
      %s28 = sadd.s32 %s27, 1
      %s29 = scalar_select %p26, %s27, %s28
      %p32 = pneg %p26
      %p33 = scmp.eq.s32.totalorder %s17, 1
      %p34 = por %p32, %p33
      %p35 = scmp.ne.s32.totalorder %s27, %s30
      %p36 = scmp.eq.s32.totalorder %s17, 0
      %p37 = por %p35, %p36
      %p38 = scmp.ne.s32.totalorder %s27, %s30
      %p39 = scmp.eq.s32.totalorder %s22, 1
      %p40 = por %p38, %p39
      %p41 = scmp.ne.s32.totalorder %s30, %s31
      %p42 = scmp.eq.s32.totalorder %s22, 0
      %p43 = por %p41, %p42
      %p44 = scmp.ne.s32.totalorder %s30, %s31
      %p45 = scmp.eq.s32.totalorder %s23, 1
      %p46 = por %p44, %p45
      %p48 = scmp.ne.s32.totalorder %s31, %s47
      %p49 = scmp.eq.s32.totalorder %s23, 0
      %p50 = por %p48, %p49
      %s52 = sadd.s32 %s51, 1
      %p55 = scmp.eq.s32.totalorder %s17, 1
      %p56 = scmp.ne.s32.totalorder %s51, %s53
      %p57 = scmp.eq.s32.totalorder %s17, 0
      %p58 = por %p56, %p57
      %p59 = scmp.ne.s32.totalorder %s51, %s53
      %p60 = scmp.eq.s32.totalorder %s22, 1
      %p61 = por %p59, %p60
      %p62 = scmp.ne.s32.totalorder %s53, %s54
      %p63 = scmp.eq.s32.totalorder %s22, 0
      %p64 = por %p62, %p63
      %p65 = scmp.ne.s32.totalorder %s53, %s54
      %p66 = scmp.eq.s32.totalorder %s23, 1
      %p67 = por %p65, %p66
      %p69 = scmp.ne.s32.totalorder %s54, %s68
      %p70 = scmp.eq.s32.totalorder %s23, 0
      %p71 = por %p69, %p70
      %s73 = sadd.s32 %s72, 1
      %p76 = scmp.eq.s32.totalorder %s17, 1
      %p77 = scmp.ne.s32.totalorder %s72, %s74
      %p78 = scmp.eq.s32.totalorder %s17, 0
      %p79 = por %p77, %p78
      %p80 = scmp.ne.s32.totalorder %s72, %s74
      %p81 = scmp.eq.s32.totalorder %s22, 1
      %p82 = por %p80, %p81
      %p83 = scmp.ne.s32.totalorder %s74, %s75
      %p84 = scmp.eq.s32.totalorder %s22, 0
      %p85 = por %p83, %p84
      %p86 = scmp.ne.s32.totalorder %s74, %s75
      %p87 = scmp.eq.s32.totalorder %s23, 1
      %p88 = por %p86, %p87
      %p90 = scmp.ne.s32.totalorder %s75, %s89
      %p91 = scmp.eq.s32.totalorder %s23, 0
      %p92 = por %p90, %p91
      %s94 = sadd.s32 %s93, 1
      %p97 = scmp.eq.s32.totalorder %s17, 1
      %p98 = scmp.ne.s32.totalorder %s93, %s95
      %p99 = scmp.eq.s32.totalorder %s17, 0
      %p100 = por %p98, %p99
      %p101 = scmp.ne.s32.totalorder %s93, %s95
      %p102 = scmp.eq.s32.totalorder %s22, 1
      %p103 = por %p101, %p102
      %p104 = scmp.ne.s32.totalorder %s95, %s96
      %p105 = scmp.eq.s32.totalorder %s22, 0
      %p106 = por %p104, %p105
      %p107 = scmp.ne.s32.totalorder %s95, %s96
      %p108 = scmp.eq.s32.totalorder %s23, 1
      %p109 = por %p107, %p108
      %p111 = scmp.ne.s32.totalorder %s96, %s110
      %p112 = scmp.eq.s32.totalorder %s23, 0
      %p113 = por %p111, %p112
      %s115 = sadd.s32 %s114, 1
      %p118 = scmp.eq.s32.totalorder %s17, 1
      %p119 = scmp.ne.s32.totalorder %s114, %s116
      %p120 = scmp.eq.s32.totalorder %s17, 0
      %p121 = por %p119, %p120
      %p122 = scmp.ne.s32.totalorder %s114, %s116
      %p123 = scmp.eq.s32.totalorder %s22, 1
      %p124 = por %p122, %p123
      %p125 = scmp.ne.s32.totalorder %s116, %s117
      %p126 = scmp.eq.s32.totalorder %s22, 0
      %p127 = por %p125, %p126
      %p128 = scmp.ne.s32.totalorder %s116, %s117
      %p129 = scmp.eq.s32.totalorder %s23, 1
      %p130 = por %p128, %p129
      %p132 = scmp.ne.s32.totalorder %s117, %s131
      %p133 = scmp.eq.s32.totalorder %s23, 0
      %p134 = por %p132, %p133
      %s135 = ssub.s32 %s17, %s24
      %p136 = scmp.eq.s32.totalorder %s135, 0
      %s138 = sadd.s32 %s137, 1
      %s139 = scalar_select %p136, %s137, %s138
      %p142 = pneg %p136
      %p143 = scmp.eq.s32.totalorder %s17, 1
      %p144 = por %p142, %p143
      %p145 = scmp.ne.s32.totalorder %s137, %s140
      %p146 = scmp.eq.s32.totalorder %s17, 0
      %p147 = por %p145, %p146
      %p148 = scmp.ne.s32.totalorder %s137, %s140
      %p149 = scmp.eq.s32.totalorder %s22, 1
      %p150 = por %p148, %p149
      %p151 = scmp.ne.s32.totalorder %s140, %s141
      %p152 = scmp.eq.s32.totalorder %s22, 0
      %p153 = por %p151, %p152
      %p154 = scmp.ne.s32.totalorder %s140, %s141
      %p155 = scmp.eq.s32.totalorder %s23, 1
      %p156 = por %p154, %p155
      %p158 = scmp.ne.s32.totalorder %s141, %s157
      %p159 = scmp.eq.s32.totalorder %s23, 0
      %p160 = por %p158, %p159
      %p161 = scmp.le.s32.totalorder 1, %s17
      %p162 = scmp.lt.s32.totalorder %s17, 3
      %p163 = pnand %p161, %p162
      %p164 = pneg %p163
      // Predicated region
      $region9: #{tpu_custom_call.1} parent=5 // pred_check
        _
      $region10: #{tpu_custom_call.1} parent=5 // pred_check_branch
        %166 = sbr.rel (%p163) target = $region12
      $region11: #{tpu_custom_call.1} parent=5 // pred_region
        %s167 = ssub.s32 %s17, 1
        // Predicated region
        $region13: #{tpu_custom_call.1} parent=11 // pred_check
          %p168 = pneg %p64
        $region14: #{tpu_custom_call.1} parent=11 // pred_check_branch
          %170 = sbr.rel (%p168) target = $region16
        $region15: #{tpu_custom_call.1} parent=11 // pred_region
          _
        $region16: #{tpu_custom_call.1} parent=11 // pred_fallthru
          _
        // Predicated region
        $region17: #{tpu_custom_call.1} parent=11 // pred_check
          %p171 = pneg %p85
        $region18: #{tpu_custom_call.1} parent=11 // pred_check_branch
          %173 = sbr.rel (%p171) target = $region20
        $region19: #{tpu_custom_call.1} parent=11 // pred_region
          _
        $region20: #{tpu_custom_call.1} parent=11 // pred_fallthru
          _
        // Predicated region
        $region21: #{tpu_custom_call.1} parent=11 // pred_check
          %p174 = pneg %p106
        $region22: #{tpu_custom_call.1} parent=11 // pred_check_branch
          %176 = sbr.rel (%p174) target = $region24
        $region23: #{tpu_custom_call.1} parent=11 // pred_region
          _
        $region24: #{tpu_custom_call.1} parent=11 // pred_fallthru
          _
        // Predicated region
        $region25: #{tpu_custom_call.1} parent=11 // pred_check
          %p177 = pneg %p127
        $region26: #{tpu_custom_call.1} parent=11 // pred_check_branch
          %179 = sbr.rel (%p177) target = $region28
        $region27: #{tpu_custom_call.1} parent=11 // pred_region
          _
        $region28: #{tpu_custom_call.1} parent=11 // pred_fallthru
          _
      $region12: #{tpu_custom_call.1} parent=5 // pred_fallthru
        _
      %p180 = scmp.lt.s32.totalorder %s17, 2
      // Predicated region
      $region29: #{tpu_custom_call.1} parent=5 // pred_check
        %p181 = pneg %p180
      $region30: #{tpu_custom_call.1} parent=5 // pred_check_branch
        %183 = sbr.rel (%p181) target = $region32
      $region31: #{tpu_custom_call.1} parent=5 // pred_region
        // Predicated region
        $region33: #{tpu_custom_call.1} parent=31 // pred_check
          %p184 = pneg %p37
        $region34: #{tpu_custom_call.1} parent=31 // pred_check_branch
          %186 = sbr.rel (%p184) target = $region36
        $region35: #{tpu_custom_call.1} parent=31 // pred_region
          %s187 = sand.u32 %s27, 1
          %s188 = scalar_lea.sflag [#allocation3], %s187
          %s189 = sand.u32 %s27, 1
          %s190 = smul.addr %s189, 8
          %s191 = scalar_lea.vmem [#allocation2], %s190
          %s193 = ssub.s32 128, 128
          %194 = vsyncadd %s188, %s193
          %s195 = smul.addr %s17, 2
          %s196 = smul.addr %s195, 64
          %s197 = scalar_lea.hbm %s0, %s196
          %s199 = sshll.u32 %s191, 4
          %s200 = int_to_ptr.vmem [resolvable:$true] %s199
          %202 = dma.hbm_to_vmem [thread:$0]  %s197, 128, %s200, %s188
        $region36: #{tpu_custom_call.1} parent=31 // pred_fallthru
          _
      $region32: #{tpu_custom_call.1} parent=5 // pred_fallthru
        _
      %p203 = scmp.le.s32.totalorder 1, %s17
      %p204 = scmp.lt.s32.totalorder %s17, 3
      %p205 = pnand %p203, %p204
      %p206 = pneg %p205
      // Predicated region
      $region37: #{tpu_custom_call.1} parent=5 // pred_check
        _
      $region38: #{tpu_custom_call.1} parent=5 // pred_check_branch
        %208 = sbr.rel (%p205) target = $region40
      $region39: #{tpu_custom_call.1} parent=5 // pred_region
        %s209 = ssub.s32 %s17, 1
        %s210 = sand.u32 %s30, 1
        %s211 = scalar_lea.sflag [#allocation3], %s210
        %s212 = sand.u32 %s30, 1
        %s213 = smul.addr %s212, 8
        %s214 = scalar_lea.vmem [#allocation2], %s213
        // Predicated region
        $region41: #{tpu_custom_call.1} parent=39 // pred_check
          %p215 = pneg %p43
        $region42: #{tpu_custom_call.1} parent=39 // pred_check_branch
          %217 = sbr.rel (%p215) target = $region44
        $region43: #{tpu_custom_call.1} parent=39 // pred_region
          %218 = dma.done %s211, 128
        $region44: #{tpu_custom_call.1} parent=39 // pred_fallthru
          _
        %s219 = sand.u32 %s30, 1
        %s220 = scalar_lea.sflag [#allocation3], %s219
        %s221 = sand.u32 %s30, 1
        %s222 = smul.addr %s221, 8
        %s223 = scalar_lea.vmem [#allocation2], %s222
        %p224 = pneg %p43
        %p225 = pneg %p40
        %p226 = pneg %p64
        %p227 = pneg %p61
        %p228 = pneg %p85
        %p229 = pneg %p82
        %p230 = pneg %p106
        %p231 = pneg %p103
        %p232 = pneg %p127
        %p233 = pneg %p124
        %p234 = pneg %p153
        %p235 = pneg %p150
        %s236 = sand.u32 %s140, 1
        %s237 = scalar_lea.sflag [#allocation4], %s236
        %s238 = sand.u32 %s140, 1
        %s239 = smul.addr %s238, 8
        %s240 = scalar_lea.vmem [#allocation5], %s239
        %v241 = vld [vmem:[%s214] sm:$0xf]
        %vm242 = vcmask 1043456
        %v243 = vsel %vm242, %v241, 0.0
        %244 = vadd.xlane.f32.xlu0 %v243
        %v245 = vpop.xlane.xlu0 %244
        %v246 = vld [vmem:[%s214 + $0x4] sm:$0xf]
        %v247 = vsel %vm242, %v246, 0.0
        %248 = vadd.xlane.f32.xlu0 %v247
        %v249 = vpop.xlane.xlu0 %248
        %v250 = vadd.f32 %v245, %v249
        %v251 = vmul.f32 %v250, 0.00390625
        %v252 = vld [vmem:[%s1] sm:$0xf]
        %v253 = vld [vmem:[%s2] sm:$0x1]
        %v255 = vlaneseq
        %v256 = vand.u32 %v255, 127
        %v257 = vlaneseq
        %v258 = vshrl.u32 %v257, 7
        %v259 = vsub.s32 %v256, %v258
        %v260 = vrot.slane %v251, %v259
        %vm261 = vcmask 31744
        %v262 = vsel %vm261, %v260, 0
        %v265 = vsel %vm242, %v252, 0
        %267 = vmatprep.subr.mxu0 0.0
        %268 = vmatpush1.msra.mxu0 %v265
        %269 = vmatprep.subr.mxu0 0.0
        %270 = vmatpush1.msra.mxu0 0.0
        %271 = vmatprep.subr.mxu0 0.0
        %272 = vmatpush1.msra.mxu0 0.0
        %273 = vmatprep.subr.mxu0 0.0
        %274 = vmatpush1.msra.mxu0 0.0
        %275 = vmatprep.subr.mxu0 0.0
        %276 = vmatpush1.msra.mxu0 0.0
        %277 = vmatprep.subr.mxu0 0.0
        %278 = vmatpush1.msra.mxu0 0.0
        %279 = vmatprep.subr.mxu0 0.0
        %280 = vmatpush1.msra.mxu0 0.0
        %281 = vmatprep.subr.mxu0 0.0
        %282 = vmatpush1.msra.mxu0 0.0
        %283 = vmatprep.subr.mxu0 0.0
        %284 = vmatpush1.msra.mxu0 0.0
        %285 = vmatprep.subr.mxu0 0.0
        %286 = vmatpush1.msra.mxu0 0.0
        %287 = vmatprep.subr.mxu0 0.0
        %288 = vmatpush1.msra.mxu0 0.0
        %289 = vmatprep.subr.mxu0 0.0
        %290 = vmatpush1.msra.mxu0 0.0
        %291 = vmatprep.subr.mxu0 0.0
        %292 = vmatpush1.msra.mxu0 0.0
        %293 = vmatprep.subr.mxu0 0.0
        %294 = vmatpush1.msra.mxu0 0.0
        %295 = vmatprep.subr.mxu0 0.0
        %296 = vmatpush1.msra.mxu0 0.0
        %297 = vmatprep.subr.mxu0 0.0
        %298 = vmatpush1.msra.mxu0 0.0
        %299 = vmatprep.subr.mxu0 0.0
        %300 = vmatpush1.msra.mxu0 0.0
        %301 = vmatprep.subr.mxu0 0.0
        %302 = vmatpush1.msra.mxu0 0.0
        %303 = vmatprep.subr.mxu0 0.0
        %304 = vmatpush1.msra.mxu0 0.0
        %305 = vmatprep.subr.mxu0 0.0
        %306 = vmatpush1.msra.mxu0 0.0
        %307 = vmatprep.subr.mxu0 0.0
        %308 = vmatpush1.msra.mxu0 0.0
        %309 = vmatprep.subr.mxu0 0.0
        %310 = vmatpush1.msra.mxu0 0.0
        %311 = vmatprep.subr.mxu0 0.0
        %312 = vmatpush1.msra.mxu0 0.0
        %313 = vmatprep.subr.mxu0 0.0
        %314 = vmatpush1.msra.mxu0 0.0
        %315 = vmatprep.subr.mxu0 0.0
        %316 = vmatpush1.msra.mxu0 0.0
        %317 = vmatprep.subr.mxu0 0.0
        %318 = vmatpush1.msra.mxu0 0.0
        %319 = vmatprep.subr.mxu0 0.0
        %320 = vmatpush1.msra.mxu0 0.0
        %321 = vmatprep.subr.mxu0 0.0
        %322 = vmatpush1.msra.mxu0 0.0
        %323 = vmatprep.subr.mxu0 0.0
        %324 = vmatpush1.msra.mxu0 0.0
        %325 = vmatprep.subr.mxu0 0.0
        %326 = vmatpush1.msra.mxu0 0.0
        %327 = vmatprep.subr.mxu0 0.0
        %328 = vmatpush1.msra.mxu0 0.0
        %329 = vmatprep.subr.mxu0 0.0
        %330 = vmatpush1.msra.mxu0 0.0
        %331 = vmatprep.mubr.f32.mxu0 0.0
        %332 = vmatmul.mubr.f32.gmra.mrb[0].mxu0 %v262
        %v333 = vpop.f32.mrb[0].mxu0
        %v334 = vadd.f32 %v253, %v333
        %v335 = vpop.f32.mrb[0].mxu0
        %336 = vdwg.mxu0
        %v337 = vmax.f32 %v334, 0.0
        %v338 = vld [vmem:[%s3] sm:$0x3]
        %v339 = vld [vmem:[%s4] sm:$0x1]
        %vm340 = vcmask 15360
        %v342 = vsel %vm340, %v337, 0
        %vm344 = vcmask 1041408
        %v346 = vsel %vm344, %v338, 0
        %348 = vmatprep.subr.mxu0 0.0
        %349 = vmatpush1.msra.mxu0 %v346
        %350 = vmatprep.subr.mxu0 0.0
        %351 = vmatpush1.msra.mxu0 0.0
        %352 = vmatprep.subr.mxu0 0.0
        %353 = vmatpush1.msra.mxu0 0.0
        %354 = vmatprep.subr.mxu0 0.0
        %355 = vmatpush1.msra.mxu0 0.0
        %356 = vmatprep.subr.mxu0 0.0
        %357 = vmatpush1.msra.mxu0 0.0
        %358 = vmatprep.subr.mxu0 0.0
        %359 = vmatpush1.msra.mxu0 0.0
        %360 = vmatprep.subr.mxu0 0.0
        %361 = vmatpush1.msra.mxu0 0.0
        %362 = vmatprep.subr.mxu0 0.0
        %363 = vmatpush1.msra.mxu0 0.0
        %364 = vmatprep.subr.mxu0 0.0
        %365 = vmatpush1.msra.mxu0 0.0
        %366 = vmatprep.subr.mxu0 0.0
        %367 = vmatpush1.msra.mxu0 0.0
        %368 = vmatprep.subr.mxu0 0.0
        %369 = vmatpush1.msra.mxu0 0.0
        %370 = vmatprep.subr.mxu0 0.0
        %371 = vmatpush1.msra.mxu0 0.0
        %372 = vmatprep.subr.mxu0 0.0
        %373 = vmatpush1.msra.mxu0 0.0
        %374 = vmatprep.subr.mxu0 0.0
        %375 = vmatpush1.msra.mxu0 0.0
        %376 = vmatprep.subr.mxu0 0.0
        %377 = vmatpush1.msra.mxu0 0.0
        %378 = vmatprep.subr.mxu0 0.0
        %379 = vmatpush1.msra.mxu0 0.0
        %380 = vmatprep.subr.mxu0 0.0
        %381 = vmatpush1.msra.mxu0 0.0
        %382 = vmatprep.subr.mxu0 0.0
        %383 = vmatpush1.msra.mxu0 0.0
        %384 = vmatprep.subr.mxu0 0.0
        %385 = vmatpush1.msra.mxu0 0.0
        %386 = vmatprep.subr.mxu0 0.0
        %387 = vmatpush1.msra.mxu0 0.0
        %388 = vmatprep.subr.mxu0 0.0
        %389 = vmatpush1.msra.mxu0 0.0
        %390 = vmatprep.subr.mxu0 0.0
        %391 = vmatpush1.msra.mxu0 0.0
        %392 = vmatprep.subr.mxu0 0.0
        %393 = vmatpush1.msra.mxu0 0.0
        %394 = vmatprep.subr.mxu0 0.0
        %395 = vmatpush1.msra.mxu0 0.0
        %396 = vmatprep.subr.mxu0 0.0
        %397 = vmatpush1.msra.mxu0 0.0
        %398 = vmatprep.subr.mxu0 0.0
        %399 = vmatpush1.msra.mxu0 0.0
        %400 = vmatprep.subr.mxu0 0.0
        %401 = vmatpush1.msra.mxu0 0.0
        %402 = vmatprep.subr.mxu0 0.0
        %403 = vmatpush1.msra.mxu0 0.0
        %404 = vmatprep.subr.mxu0 0.0
        %405 = vmatpush1.msra.mxu0 0.0
        %406 = vmatprep.subr.mxu0 0.0
        %407 = vmatpush1.msra.mxu0 0.0
        %408 = vmatprep.subr.mxu0 0.0
        %409 = vmatpush1.msra.mxu0 0.0
        %410 = vmatprep.subr.mxu0 0.0
        %411 = vmatpush1.msra.mxu0 0.0
        %412 = vmatprep.mubr.f32.mxu0 0.0
        %413 = vmatmul.mubr.f32.gmra.mrb[0].mxu0 %v342
        %v414 = vpop.f32.mrb[0].mxu0
        %v415 = vadd.f32 %v339, %v414
        %v416 = vpop.f32.mrb[0].mxu0
        %417 = vdwg.mxu0
        %v418 = vsub.f32 0.0, %v415
        %v419 = vmul.f32 %v418, 1.442695
        %v420 = vpow.pop %v419
        %v421 = vadd.f32 %v420, 1.0
        %v422 = vrcp.pop %v421
        %v423 = vmul.f32 1.0, %v422
        %v424 = vld [vmem:[%s214] sm:$0xff]
        %v425 = vlaneseq
        %v426 = vshrl.u32 %v425, 7
        %v427 = vsub.s32 0, %v426
        %v428 = vrot.slane %v423, %v427
        %430 = vbcast.lane.b32.xlu0 %v428, 256
        %v431 = vpop.permute.xlu0 %430
        %v434 = vunpack.c.l.s4 839922192
        %v435 = vunpack.c.0.s8 %v434
        %v436 = vlaneseq
        %v437 = vshrl.u32 %v436, 7
        %v438 = vsub.s32 %v435, %v437
        %v439 = vrot.slane %v431, %v438
        %v441 = vmul.f32 %v424, %v439
        %442 = vst [vmem:[%s240] sm:$0xff] %v441
        %s443 = sand.u32 %s140, 1
        %s444 = scalar_lea.sflag [#allocation4], %s443
        %s445 = sand.u32 %s140, 1
        %s446 = smul.addr %s445, 8
        %s447 = scalar_lea.vmem [#allocation5], %s446
        // Predicated region
        $region45: #{tpu_custom_call.1} parent=39 // pred_check
          %p448 = pneg %p150
        $region46: #{tpu_custom_call.1} parent=39 // pred_check_branch
          %450 = sbr.rel (%p448) target = $region48
        $region47: #{tpu_custom_call.1} parent=39 // pred_region
          %s452 = ssub.s32 128, 128
          %453 = vsyncadd %s444, %s452
          %s454 = smul.addr %s22, 2
          %s455 = smul.addr %s454, 64
          %s456 = scalar_lea.hbm %s5, %s455
          %s458 = sshll.u32 %s447, 4
          %s459 = int_to_ptr.vmem [resolvable:$true] %s458
          %461 = dma.vmem_to_hbm [thread:$0]  %s459, 128, %s456, %s444
        $region48: #{tpu_custom_call.1} parent=39 // pred_fallthru
          _
      $region40: #{tpu_custom_call.1} parent=5 // pred_fallthru
        _
      %p462 = scmp.le.s32.totalorder 2, %s17
      // Predicated region
      $region49: #{tpu_custom_call.1} parent=5 // pred_check
        %p463 = pneg %p462
      $region50: #{tpu_custom_call.1} parent=5 // pred_check_branch
        %465 = sbr.rel (%p463) target = $region52
      $region51: #{tpu_custom_call.1} parent=5 // pred_region
        %s466 = ssub.s32 %s17, 2
        // Predicated region
        $region53: #{tpu_custom_call.1} parent=51 // pred_check
          %p467 = pneg %p156
        $region54: #{tpu_custom_call.1} parent=51 // pred_check_branch
          %469 = sbr.rel (%p467) target = $region56
        $region55: #{tpu_custom_call.1} parent=51 // pred_region
          %s470 = sand.u32 %s141, 1
          %s471 = scalar_lea.sflag [#allocation4], %s470
          %s472 = sand.u32 %s141, 1
          %s473 = smul.addr %s472, 8
          %s474 = scalar_lea.vmem [#allocation5], %s473
          %475 = dma.done %s471, 128
        $region56: #{tpu_custom_call.1} parent=51 // pred_fallthru
          _
      $region52: #{tpu_custom_call.1} parent=5 // pred_fallthru
        _
    $region6: #{tpu_custom_call.1} parent=1 // loop_footer
      %s21 = sadd.s32 1, %s17
    $region7: #{tpu_custom_call.1} parent=1 // loop_footer_branch
      %16 = sbr.rel target = $region3
    $region8: #{tpu_custom_call.1} parent=1 // loop_exit
      _
    %476 = vsyncpa [#allocation3], 1
    %s477 = scalar_lea.sflag [#allocation3], 1
    %478 = vsyncpa %s477, 1
    %479 = vsyncpa [#allocation4], 1
    %s480 = scalar_lea.sflag [#allocation4], 1
    %481 = vsyncpa %s480, 1

</llo_original>
